<compile_context>
chip_gen: v7x
topology: tpu7x:2x2x1
jax: 0.10.0
libtpu: 0.0.40
codegen_flags: <defaults>
</compile_context>

<pallas_src>
import functools

import jax
import jax.numpy as jnp
from jax.experimental import pallas as pl
from jax.experimental.pallas import tpu as pltpu


# ---------------------------------------------------------------------------
# Tiling helpers
# ---------------------------------------------------------------------------
def _round_up(x, m):
    return ((x + m - 1) // m) * m


def _pick_tile(dim, target, align):
    """Largest tile <= target that divides `dim` and is a multiple of `align`.
    Falls back to the whole axis (single block), which satisfies Mosaic's
    (8, 128) block-shape rule via the 'equal to full dim' escape hatch."""
    if dim <= target:
        return dim
    t = (target // align) * align
    while t >= align:
        if dim % t == 0:
            return t
        t -= align
    return dim


def _tile_and_padded(dim, target, align):
    """Return (tile, padded_dim) with padded_dim % tile == 0 and tile <= target.
    Prefers an exact divisor (no padding copy); otherwise pads with zeros so the
    tile size stays bounded (no silent full-axis VMEM blowup)."""
    if dim <= target:
        return dim, dim                      # single full-axis block
    t = (target // align) * align
    cand = t
    while cand >= align:                     # prefer an exact divisor near target
        if dim % cand == 0:
            return cand, dim
        cand -= align
    return t, _round_up(dim, t)              # bounded tile + zero padding


def _mxu(t):
    # MXU operands in bf16 (higher MXU throughput, half the operand traffic);
    # accumulation and all softmax/epilogue math stay in f32.
    return t.astype(jnp.bfloat16)


# ---------------------------------------------------------------------------
# Linear (matmul) kernels
# ---------------------------------------------------------------------------
def _linear_kernel(x_ref, w_ref, o_ref, acc_ref):
    # Tiled matmul: grid = (M/tm, N/tn, K/tk); K is the sequential reduction axis.
    @pl.when(pl.program_id(2) == 0)
    def _():
        acc_ref[...] = jnp.zeros_like(acc_ref)

    acc_ref[...] += jnp.dot(
        _mxu(x_ref[...]), _mxu(w_ref[...]), preferred_element_type=jnp.float32
    )

    @pl.when(pl.program_id(2) == pl.num_programs(2) - 1)
    def _():
        o_ref[...] = acc_ref[...].astype(o_ref.dtype)


def _linear_bias_kernel(x_ref, w_ref, b_ref, o_ref, acc_ref):
    # Same as above with a fused +bias epilogue on the last K step.
    @pl.when(pl.program_id(2) == 0)
    def _():
        acc_ref[...] = jnp.zeros_like(acc_ref)

    acc_ref[...] += jnp.dot(
        _mxu(x_ref[...]), _mxu(w_ref[...]), preferred_element_type=jnp.float32
    )

    @pl.when(pl.program_id(2) == pl.num_programs(2) - 1)
    def _():
        o_ref[...] = (acc_ref[...] + b_ref[...].astype(jnp.float32)).astype(o_ref.dtype)


def _linear_k1_kernel(x_ref, w_ref, o_ref):
    # Single-K-tile fast path: no accumulator scratch, no @pl.when phases.
    o_ref[...] = jnp.dot(
        _mxu(x_ref[...]), _mxu(w_ref[...]), preferred_element_type=jnp.float32
    ).astype(o_ref.dtype)


def _linear_k1_bias_kernel(x_ref, w_ref, b_ref, o_ref):
    acc = jnp.dot(
        _mxu(x_ref[...]), _mxu(w_ref[...]), preferred_element_type=jnp.float32
    )
    o_ref[...] = (acc + b_ref[...].astype(jnp.float32)).astype(o_ref.dtype)


def pallas_linear(x2d, w, b=None, *, tm_target=512, tn_target=512, tk_target=512):
    """x2d: (M, K), w: (K, N), optional b: (N,) -> (M, N).
    Tiled over (M, N, K); unaligned big dims are zero-padded so tile sizes stay
    bounded (double-buffered footprint ~7 MiB at default targets -> fits the
    default scoped-VMEM limit on v5e / v6e / v7x)."""
    M, K = x2d.shape
    K2, N = w.shape
    assert K == K2
    tm, Mp = _tile_and_padded(M, tm_target, 8)
    tn, Np = _tile_and_padded(N, tn_target, 128)
    tk, Kp = _tile_and_padded(K, tk_target, 128)

    if (Mp, Kp) != (M, K):
        x2d = jnp.pad(x2d, ((0, Mp - M), (0, Kp - K)))
    if (Kp, Np) != (K, N):
        w = jnp.pad(w, ((0, Kp - K), (0, Np - N)))

    grid = (Mp // tm, Np // tn, Kp // tk)
    single_k = grid[2] == 1
    out_shape = jax.ShapeDtypeStruct((Mp, Np), x2d.dtype)
    cparams = pltpu.CompilerParams(
        dimension_semantics=("parallel", "parallel", "arbitrary")
    )
    x_spec = pl.BlockSpec((tm, tk), lambda i, j, k: (i, k))
    w_spec = pl.BlockSpec((tk, tn), lambda i, j, k: (k, j))
    o_spec = pl.BlockSpec((tm, tn), lambda i, j, k: (i, j))

    if b is None:
        kernel = _linear_k1_kernel if single_k else _linear_kernel
        in_specs = [x_spec, w_spec]
        operands = (x2d, w)
    else:
        b2d = b.reshape(1, N)
        if Np != N:
            b2d = jnp.pad(b2d, ((0, 0), (0, Np - N)))
        kernel = _linear_k1_bias_kernel if single_k else _linear_bias_kernel
        in_specs = [x_spec, w_spec, pl.BlockSpec((1, tn), lambda i, j, k: (0, j))]
        operands = (x2d, w, b2d)

    scratch = [] if single_k else [pltpu.VMEM((tm, tn), jnp.float32)]

    out = pl.pallas_call(
        kernel,
        out_shape=out_shape,
        grid=grid,
        in_specs=in_specs,
        out_specs=o_spec,
        scratch_shapes=scratch,
        compiler_params=cparams,
    )(*operands)

    if (Mp, Np) != (M, N):
        out = out[:M, :N]
    return out


# ---------------------------------------------------------------------------
# Flash-style attention kernel
# ---------------------------------------------------------------------------
def _attention_kernel(q_ref, k_ref, v_ref, o_ref, m_sc, l_sc, acc_sc,
                      *, scale, heads, dim_head):
    # Blocks: q (1, tq, h*dh), k/v (1, tkv, h*dh), o (1, tq, h*dh)  -- lane-dense.
    # grid = (batch, n/tq, m/tkv); the kv axis is the online-softmax reduction axis.
    kv_idx = pl.program_id(2)

    @pl.when(kv_idx == 0)
    def _():
        m_sc[...] = jnp.full_like(m_sc, -jnp.inf)
        l_sc[...] = jnp.zeros_like(l_sc)
        acc_sc[...] = jnp.zeros_like(acc_sc)

    d = dim_head
    # Fold the softmax scale into q (n*d work instead of n*m); bf16 MXU operands.
    qb = _mxu(q_ref[0].astype(jnp.float32) * scale)     # (tq,  h*dh)
    kb = _mxu(k_ref[0])                                 # (tkv, h*dh)
    vb = _mxu(v_ref[0])                                 # (tkv, h*dh)

    # Head split via static lane slices + stack (in-kernel relayout; hides under
    # MXU/EUP work and removes the XLA-side 'b n (h d) -> (b h) n d' HBM passes).
    q = jnp.stack([qb[:, i * d:(i + 1) * d] for i in range(heads)], axis=0)
    k = jnp.stack([kb[:, i * d:(i + 1) * d] for i in range(heads)], axis=0)
    v = jnp.stack([vb[:, i * d:(i + 1) * d] for i in range(heads)], axis=0)

    s = jnp.einsum("hqd,hkd->hqk", q, k, preferred_element_type=jnp.float32)

    m_prev = m_sc[...]
    m_new = jnp.maximum(m_prev, s.max(axis=-1, keepdims=True))
    alpha = jnp.exp(m_prev - m_new)
    p = jnp.exp(s - m_new)                               # f32 softmax math (VPU/EUP)
    l_sc[...] = alpha * l_sc[...] + p.sum(axis=-1, keepdims=True)
    acc_sc[...] = alpha * acc_sc[...] + jnp.einsum(
        "hqk,hkd->hqd", _mxu(p), v, preferred_element_type=jnp.float32
    )
    m_sc[...] = m_new

    @pl.when(kv_idx == pl.num_programs(2) - 1)
    def _():
        inv_l = pl.reciprocal(l_sc[...], approx=True)    # EUP slot, nearly free
        out = acc_sc[...] * inv_l                        # (h, tq, dh) f32
        # Head merge via lane-axis concat -> lane-dense (tq, h*dh) output slab.
        o_ref[0] = jnp.concatenate(
            [out[i] for i in range(heads)], axis=-1
        ).astype(o_ref.dtype)


def pallas_attention(q, k, v, scale, heads, dim_head, *, tq_target=256, tkv_target=256):
    """q: (b, n, h*dh), k/v: (b, m, h*dh) -> (b, n, h*dh).
    kv tiles use online softmax so the (n, m) logits never fully materialize.
    Per-step VMEM (double-buffered blocks + s/p temporaries) stays under ~8 MiB at
    the default targets, within the default scoped-VMEM limit on v5e/v6e/v7x."""
    b, n, inner = q.shape
    _, m, _ = k.shape
    assert inner == heads * dim_head
    # TODO(synk): very long, non-divisible sequence lengths fall back to a full-axis
    # kv block; a masked-tail variant would bound VMEM for arbitrary lengths.
    tq = _pick_tile(n, tq_target, 8)
    tkv = _pick_tile(m, tkv_target, 8)
    grid = (b, n // tq, m // tkv)
    kernel = functools.partial(
        _attention_kernel, scale=scale, heads=heads, dim_head=dim_head
    )
    return pl.pallas_call(
        kernel,
        out_shape=jax.ShapeDtypeStruct((b, n, inner), q.dtype),
        grid=grid,
        in_specs=[
            pl.BlockSpec((1, tq, inner), lambda bi, qi, ki: (bi, qi, 0)),
            pl.BlockSpec((1, tkv, inner), lambda bi, qi, ki: (bi, ki, 0)),
            pl.BlockSpec((1, tkv, inner), lambda bi, qi, ki: (bi, ki, 0)),
        ],
        out_specs=pl.BlockSpec((1, tq, inner), lambda bi, qi, ki: (bi, qi, 0)),
        scratch_shapes=[
            pltpu.VMEM((heads, tq, 1), jnp.float32),          # running row max
            pltpu.VMEM((heads, tq, 1), jnp.float32),          # running row sum
            pltpu.VMEM((heads, tq, dim_head), jnp.float32),   # output accumulator
        ],
        compiler_params=pltpu.CompilerParams(
            dimension_semantics=("parallel", "parallel", "arbitrary")
        ),
    )(q, k, v)


# ---------------------------------------------------------------------------
# MSA module (Pallas forward)
# ---------------------------------------------------------------------------
class MSAPallas:
    def __init__(self, dim, heads=5, dim_head=64, dropout=0.0, key=None):
        inner_dim = dim_head * heads
        self.dim = dim
        self.heads = heads
        self.dim_head = dim_head
        self.inner_dim = inner_dim
        self.scale = dim_head ** (-0.5)
        key = jax.random.PRNGKey(42) if key is None else key
        k1, k2, k3, k4 = jax.random.split(key, 4)
        # PyTorch Linear stores weight as (out, in); we keep (in, out) for x @ W.
        self.w_q = jax.random.normal(k1, (dim, inner_dim), jnp.float32) * 0.02
        w_kv = jax.random.normal(k2, (dim, inner_dim * 2), jnp.float32) * 0.02
        self.w_kv = w_kv
        # Pre-split k / v weights (done once at init): three separate projections
        # avoid any XLA-side activation slicing / head transposes between kernels.
        self.w_k = w_kv[:, :inner_dim]
        self.w_v = w_kv[:, inner_dim:]
        self.w_out = jax.random.normal(k3, (inner_dim, dim), jnp.float32) * 0.02
        self.b_out = jax.random.normal(k4, (dim,), jnp.float32) * 0.02

    def __call__(self, x, context=None, kv_include_self=False):
        b, n, _ = x.shape
        inner = self.inner_dim
        context = x if context is None else context
        if kv_include_self:
            context = jnp.concatenate((x, context), axis=1)
        m = context.shape[1]

        # Projections (Pallas tiled matmuls, bf16 MXU operands, f32 accumulation).
        q = pallas_linear(x.reshape(b * n, self.dim), self.w_q).reshape(b, n, inner)
        k = pallas_linear(context.reshape(b * m, self.dim), self.w_k).reshape(b, m, inner)
        v = pallas_linear(context.reshape(b * m, self.dim), self.w_v).reshape(b, m, inner)

        # Fused flash-style attention; head split/merge happens inside the kernel,
        # so q/k/v/out all stay in the natural (b, seq, h*dh) layout (free reshapes).
        out = pallas_attention(q, k, v, self.scale, self.heads, self.dim_head)

        # Output projection with fused bias epilogue; dropout p=0.0 is identity.
        out = pallas_linear(out.reshape(b * n, inner), self.w_out, self.b_out)
        return out.reshape(b, n, self.dim)


# ---------------------------------------------------------------------------
# Pure-JAX reference for correctness check (self-attention path)
# ---------------------------------------------------------------------------
def msa_reference(module, x):
    b, n, _ = x.shape
    h, dh = module.heads, module.dim_head
    q = x @ module.w_q
    k = x @ module.w_k
    v = x @ module.w_v

    def split_heads(t):
        return t.reshape(b, -1, h, dh).transpose(0, 2, 1, 3)

    qh, kh, vh = split_heads(q), split_heads(k), split_heads(v)
    dots = jnp.einsum("bhid,bhjd->bhij", qh, kh) * module.scale
    attn = jax.nn.softmax(dots, axis=-1)
    out = jnp.einsum("bhij,bhjd->bhid", attn, vh)
    out = out.transpose(0, 2, 1, 3).reshape(b, n, h * dh)
    return out @ module.w_out + module.b_out


if __name__ == "__main__":
    # Small shapes: batch=2, seq=8, dim=32, heads=2, dim_head=16
    B, N, DIM, HEADS, DIM_HEAD = 2, 8, 32, 2, 16
    key = jax.random.PRNGKey(0)
    kx, kp = jax.random.split(key)
    x = jax.random.normal(kx, (B, N, DIM), jnp.float32)

    msa = MSAPallas(DIM, heads=HEADS, dim_head=DIM_HEAD, dropout=0.0, key=kp)
    out = jax.block_until_ready(msa(x))

    ref = msa_reference(msa, x)
    assert out.shape == (B, N, DIM), out.shape
    # 5e-3 tolerance: bf16 MXU operands (f32 accumulation / softmax statistics) and
    # the approx-reciprocal softmax denominator vs the exact f32 reference.
    assert jnp.allclose(out, ref, atol=5e-3, rtol=5e-3), float(
        jnp.max(jnp.abs(out - ref))
    )
    print("KERNEL_OK")
</pallas_src>

<mosaic_0001>
module attributes {stable_mosaic.version = 11 : i64} {
  func.func @_linear_k1_kernel(%arg0: i32, %arg1: i32, %arg2: i32, %arg3: memref<16x32xf32, #tpu.memory_space<vmem>>, %arg4: memref<32x32xf32, #tpu.memory_space<vmem>>, %arg5: memref<16x32xf32, #tpu.memory_space<vmem>>) attributes {dimension_semantics = [#tpu.dimension_semantics<parallel>, #tpu.dimension_semantics<parallel>, #tpu.dimension_semantics<arbitrary>], iteration_bounds = array<i64: 1, 1, 1>, scalar_prefetch = 0 : i64, scratch_operands = 0 : i64, tpu.core_type = #tpu.core_type<tc>, window_params = [{transform_indices = @transform_0, window_bounds = array<i64: 16, 32>}, {transform_indices = @transform_1, window_bounds = array<i64: 32, 32>}, {transform_indices = @transform_2, window_bounds = array<i64: 16, 32>}]} {
    %c0 = arith.constant 0 : index
    %c0_0 = arith.constant 0 : index
    %0 = vector.load %arg3[%c0, %c0_0] : memref<16x32xf32, #tpu.memory_space<vmem>>, vector<16x32xf32>
    %1 = arith.truncf %0 : vector<16x32xf32> to vector<16x32xbf16>
    %c0_1 = arith.constant 0 : index
    %c0_2 = arith.constant 0 : index
    %2 = vector.load %arg4[%c0_1, %c0_2] : memref<32x32xf32, #tpu.memory_space<vmem>>, vector<32x32xf32>
    %3 = arith.truncf %2 : vector<32x32xf32> to vector<32x32xbf16>
    %cst = arith.constant dense<0.000000e+00> : vector<16x32xf32>
    %4 = tpu.matmul %1, %3, %cst {dimension_numbers = #tpu.dot_dimension_numbers<[1], [0], [0], [1], [0, 0, 1, 1], [], []>} : vector<16x32xbf16>, vector<32x32xbf16>, vector<16x32xf32> -> vector<16x32xf32>
    %c0_3 = arith.constant 0 : index
    %c0_4 = arith.constant 0 : index
    %5 = vector.load %arg5[%c0_3, %c0_4] : memref<16x32xf32, #tpu.memory_space<vmem>>, vector<16x32xf32>
    tpu.vector_store %arg5[%c0_3, %c0_4], %4 {strides = array<i32>} : memref<16x32xf32, #tpu.memory_space<vmem>>, vector<16x32xf32>,
    return
  }
  func.func @transform_0(%arg0: i32, %arg1: i32, %arg2: i32) -> (i32, i32) {
    %c0_i32 = arith.constant 0 : i32
    return %arg0, %arg2 : i32, i32
  }
  func.func @transform_1(%arg0: i32, %arg1: i32, %arg2: i32) -> (i32, i32) {
    %c0_i32 = arith.constant 0 : i32
    return %arg2, %arg1 : i32, i32
  }
  func.func @transform_2(%arg0: i32, %arg1: i32, %arg2: i32) -> (i32, i32) {
    %c0_i32 = arith.constant 0 : i32
    return %arg0, %arg1 : i32, i32
  }
}

</mosaic_0001>

<llo_original>
// kernel: tpu_custom_call.1
$region0: #{tpu_custom_call.1}
  #allocation0 [shape = 'u32[]', space=smem, size = 0x4, offset = 0x4, fixed_abs, tag = 'smem constant byte address 0x4 - core index']
  #allocation1 [shape = 'u32[144,128]{1,0:T(1,128)}', space=vmem, size = 0x12000, scoped, tag = 'internal scratch']
  %s0 = inlined_call_operand.hbm [shape: f32[16,32], index: 0, kind: input, shape index: {}]
  %s1 = inlined_call_operand.hbm [shape: f32[32,32], index: 1, kind: input, shape index: {}]
  %s2 = inlined_call_operand.hbm [shape: f32[16,32], index: 2, kind: output, shape index: {}]
  %s3 = sld [smem:[#allocation0]]
  $region26: #{tpu_custom_call.1} parent=0
    _
  %s5 = ssub.s32 1, %s3
  %s6 = scalar_select 0, %s5, %s3
  $region1: #{tpu_custom_call.1} parent=0
    #allocation2 [shape = 'u8[8192]{0}', space=vmem, size = 0x2000, scoped, tag = 'input window, operand 0, single buffered']
    #allocation3 [shape = 's32[1]{0}', space=sflag, size = 0x4, scoped, tag = 'scoped memory for tpu_custom_call.1']
    #allocation4 [shape = 's32[1]{0}', space=sflag, size = 0x4, scoped, tag = 'scoped memory for tpu_custom_call.1']
    #allocation5 [shape = 'u8[16384]{0}', space=vmem, size = 0x4000, scoped, tag = 'input window, operand 1, single buffered']
    #allocation6 [shape = 's32[1]{0}', space=sflag, size = 0x4, scoped, tag = 'scoped memory for tpu_custom_call.1']
    #allocation7 [shape = 'u8[8192]{0}', space=vmem, size = 0x2000, scoped, tag = 'output window, operand 0, single buffered']
    %7 = vsyncpa [#allocation3], 0
    %8 = vsyncpa [#allocation6], 0
    %9 = vsyncpa [#allocation4], 0
    // Predicated region
    $region2: #{tpu_custom_call.1} parent=1 // pred_check
      _
    $region3: #{tpu_custom_call.1} parent=1 // pred_check_branch
      %11 = sbr.rel (0) target = $region5
    $region4: #{tpu_custom_call.1} parent=1 // pred_region
      %s13 = ssub.s32 256, 256
      %14 = vsyncadd [#allocation3], %s13
      %s15 = sshll.u32 [#allocation2], 4
      %s16 = int_to_ptr.vmem [resolvable:$true] %s15
      %21 = dma.hbm_to_vmem [thread:$0]  %s0, 256, %s16, [#allocation3], 128, 128, 8
    $region5: #{tpu_custom_call.1} parent=1 // pred_fallthru
      _
    // Predicated region
    $region6: #{tpu_custom_call.1} parent=1 // pred_check
      _
    $region7: #{tpu_custom_call.1} parent=1 // pred_check_branch
      %23 = sbr.rel (0) target = $region9
    $region8: #{tpu_custom_call.1} parent=1 // pred_region
      %s25 = ssub.s32 512, 512
      %26 = vsyncadd [#allocation6], %s25
      %s27 = sshll.u32 [#allocation5], 4
      %s28 = int_to_ptr.vmem [resolvable:$true] %s27
      %33 = dma.hbm_to_vmem [thread:$0]  %s1, 512, %s28, [#allocation6], 128, 128, 8
    $region9: #{tpu_custom_call.1} parent=1 // pred_fallthru
      _
    // Predicated region
    $region10: #{tpu_custom_call.1} parent=1 // pred_check
      _
    $region11: #{tpu_custom_call.1} parent=1 // pred_check_branch
      %35 = sbr.rel (0) target = $region13
    $region12: #{tpu_custom_call.1} parent=1 // pred_region
      %36 = dma.done [#allocation3], 256
    $region13: #{tpu_custom_call.1} parent=1 // pred_fallthru
      _
    // Predicated region
    $region14: #{tpu_custom_call.1} parent=1 // pred_check
      _
    $region15: #{tpu_custom_call.1} parent=1 // pred_check_branch
      %38 = sbr.rel (0) target = $region17
    $region16: #{tpu_custom_call.1} parent=1 // pred_region
      %39 = dma.done [#allocation6], 512
    $region17: #{tpu_custom_call.1} parent=1 // pred_fallthru
      _
    %v41 = vld [vmem:[#allocation2] sm:$0xff]
    %v42 = vld [vmem:[#allocation2 + $0x8] sm:$0xff]
    %v43 = vpack.c.bf16 %v42, %v41
    %v44 = vld [vmem:[#allocation5] sm:$0xff]
    %v45 = vld [vmem:[#allocation5 + $0x8] sm:$0xff]
    %v46 = vld [vmem:[#allocation5 + $0x10] sm:$0xff]
    %v47 = vld [vmem:[#allocation5 + $0x18] sm:$0xff]
    %v48 = vpack.c.bf16 %v45, %v44
    %v49 = vpack.c.bf16 %v47, %v46
    %vm50 = vcmask 261120
    %v52 = vsel %vm50, %v43, 0
    %54 = vmatprep.subr.bf16.mxu0 0
    %55 = vmatpush1.bf16.msra.mxu0 %v48
    %56 = vmatprep.subr.bf16.mxu0 0
    %57 = vmatpush1.bf16.msra.mxu0 %v49
    %58 = vmatprep.subr.bf16.mxu0 0
    %59 = vmatpush1.bf16.msra.mxu0 0
    %60 = vmatprep.subr.bf16.mxu0 0
    %61 = vmatpush1.bf16.msra.mxu0 0
    %62 = vmatprep.subr.bf16.mxu0 0
    %63 = vmatpush1.bf16.msra.mxu0 0
    %64 = vmatprep.subr.bf16.mxu0 0
    %65 = vmatpush1.bf16.msra.mxu0 0
    %66 = vmatprep.subr.bf16.mxu0 0
    %67 = vmatpush1.bf16.msra.mxu0 0
    %68 = vmatprep.subr.bf16.mxu0 0
    %69 = vmatpush1.bf16.msra.mxu0 0
    %70 = vmatprep.subr.bf16.mxu0 0
    %71 = vmatpush1.bf16.msra.mxu0 0
    %72 = vmatprep.subr.bf16.mxu0 0
    %73 = vmatpush1.bf16.msra.mxu0 0
    %74 = vmatprep.subr.bf16.mxu0 0
    %75 = vmatpush1.bf16.msra.mxu0 0
    %76 = vmatprep.subr.bf16.mxu0 0
    %77 = vmatpush1.bf16.msra.mxu0 0
    %78 = vmatprep.subr.bf16.mxu0 0
    %79 = vmatpush1.bf16.msra.mxu0 0
    %80 = vmatprep.subr.bf16.mxu0 0
    %81 = vmatpush1.bf16.msra.mxu0 0
    %82 = vmatprep.subr.bf16.mxu0 0
    %83 = vmatpush1.bf16.msra.mxu0 0
    %84 = vmatprep.subr.bf16.mxu0 0
    %85 = vmatpush1.bf16.msra.mxu0 0
    %86 = vmatprep.mubr.bf16.mxu0 0
    %87 = vmatmul.mubr.bf16.gmra.mrb[0].mxu0 %v52
    %v88 = vpop.f32.mrb[0].mxu0
    %v89 = vadd.f32 0.0, %v88
    %v90 = vpop.f32.mrb[0].mxu0
    %v91 = vpop.f32.mrb[0].mxu0
    %v92 = vadd.f32 0.0, %v91
    %v93 = vpop.f32.mrb[0].mxu0
    %94 = vdwg.mxu0
    %95 = vst.msk [vmem:[#allocation7] sm:$0xff] %vm50, %v89
    %96 = vst.msk [vmem:[#allocation7 + $0x8] sm:$0xff] %vm50, %v92
    // Predicated region
    $region18: #{tpu_custom_call.1} parent=1 // pred_check
      _
    $region19: #{tpu_custom_call.1} parent=1 // pred_check_branch
      %98 = sbr.rel (0) target = $region21
    $region20: #{tpu_custom_call.1} parent=1 // pred_region
      %s100 = ssub.s32 256, 256
      %101 = vsyncadd [#allocation4], %s100
      %s102 = sshll.u32 [#allocation7], 4
      %s103 = int_to_ptr.vmem [resolvable:$true] %s102
      %108 = dma.vmem_to_hbm [thread:$0]  %s103, 256, %s2, [#allocation4], 128, 128, 8
    $region21: #{tpu_custom_call.1} parent=1 // pred_fallthru
      _
    // Predicated region
    $region22: #{tpu_custom_call.1} parent=1 // pred_check
      _
    $region23: #{tpu_custom_call.1} parent=1 // pred_check_branch
      %110 = sbr.rel (0) target = $region25
    $region24: #{tpu_custom_call.1} parent=1 // pred_region
      %111 = dma.done [#allocation4], 256
    $region25: #{tpu_custom_call.1} parent=1 // pred_fallthru
      _
    %112 = vsyncpa [#allocation3], 1
    %113 = vsyncpa [#allocation6], 1
    %114 = vsyncpa [#allocation4], 1

</llo_original>
